<compile_context>
chip_gen: v5e
topology: v5e:2x2
jax: 0.10.0
libtpu: 0.0.40
codegen_flags: <defaults>
</compile_context>

<pallas_src>
import math
import jax
import jax.numpy as jnp
import numpy as np
from jax.experimental import pallas as pl
from jax.experimental.pallas import tpu as pltpu

K_TAPS = 15
PAD = 7
POOL = 2
BN_EPS = 1e-5
INV_SQRT2 = 1.0 / math.sqrt(2.0)
LANE = 128
# Explicit scoped-VMEM limit (review: do not inherit the default).
# 32 MiB is safe on v5e/v6e/v7x; re-derive tile sizes for v7x's 64 MiB physical VMEM.
VMEM_LIMIT_BYTES = 32 * 1024 * 1024


def stem_forward(x, p, *, tile_n=None):
    """x: (B, 4, N) channel-first (PyTorch NCW). Returns (B, D, N//2) float32."""
    B, Cin, N = x.shape
    assert Cin == 4
    # TODO(synk): odd-length AttentionPool zero-padding branch not implemented (N must be even).
    assert N % POOL == 0
    D = p['w1'].shape[-1]
    Dp = ((D + LANE - 1) // LANE) * LANE          # lane-dense channel dim

    if tile_n is None:
        tile_n = N
        for cand in (1024, 512, 256, 128, 64, 32, 16):
            if N % cand == 0:
                tile_n = cand
                break
    assert N % tile_n == 0 and tile_n % POOL == 0
    if tile_n != N:
        assert (tile_n // POOL) % 8 == 0, "tile_n//2 must be a multiple of 8 (sublane tiling)"
    num_tiles = N // tile_n

    # ---- host-side layout prep (cheap; channel-last, zero-pad halo, pad D to Dp) ----
    xl = jnp.transpose(x, (0, 2, 1)).astype(jnp.float32)        # (B, N, 4)
    xp = jnp.pad(xl, ((0, 0), (PAD, PAD), (0, 0)))              # (B, N+14, 4)
    Np = N + 2 * PAD

    def pad_d(a):
        widths = [(0, 0)] * (a.ndim - 1) + [(0, Dp - D)]
        return jnp.pad(a, widths)

    # im2col weight: rows ordered tap-major / channel-minor, matching the patch build below.
    w1 = pad_d(p['w1']).reshape(K_TAPS * Cin, Dp).astype(jnp.bfloat16)   # (60, Dp) bf16
    b1 = pad_d(p['b1']).reshape(1, Dp).astype(jnp.float32)
    gamma = pad_d(p['gamma']).reshape(1, Dp).astype(jnp.float32)         # padded with 0 -> padded
    beta = pad_d(p['beta']).reshape(1, Dp).astype(jnp.float32)           # channels stay exactly 0
    w2 = jnp.pad(p['w2t'], ((0, Dp - D), (0, Dp - D))).astype(jnp.bfloat16)  # (Dp, Dp) bf16
    b2 = pad_d(p['b2']).reshape(1, Dp).astype(jnp.float32)

    # ---- shared per-tile conv (im2col, single K=60 bf16 MXU matmul, f32 accumulation) ----
    def conv_tile(xp_ref, w1_ref, b1_ref):
        i = pl.program_id(0)
        start = pl.multiple_of(i * tile_n, 8)
        win = xp_ref[:, pl.ds(start, tile_n + K_TAPS - 1), :]           # (B, tile_n+14, 4) f32
        patches = jnp.concatenate(
            [win[:, k:k + tile_n, :] for k in range(K_TAPS)], axis=-1)  # (B, tile_n, 60)
        y = jnp.einsum('bnc,cd->bnd', patches.astype(jnp.bfloat16), w1_ref[...],
                       preferred_element_type=jnp.float32)              # (B, tile_n, Dp) f32
        return y + b1_ref[...]

    # ---- pass 1: accumulate per-channel sum / sum-of-squares for BatchNorm ----
    def stats_kernel(xp_ref, w1_ref, b1_ref, s_ref, q_ref):
        @pl.when(pl.program_id(0) == 0)
        def _():
            s_ref[...] = jnp.zeros_like(s_ref)
            q_ref[...] = jnp.zeros_like(q_ref)
        y = conv_tile(xp_ref, w1_ref, b1_ref)
        s_ref[...] += jnp.sum(y, axis=(0, 1))[None, :]
        q_ref[...] += jnp.sum(y * y, axis=(0, 1))[None, :]

    # ---- pass 2: folded BN -> GELU -> 1x1 conv -> residual -> sigmoid pool-2 ----
    def apply_kernel(xp_ref, w1_ref, b1_ref, sc_ref, sh_ref, w2_ref, b2_ref, o_ref):
        y = conv_tile(xp_ref, w1_ref, b1_ref)                           # (B, tile_n, Dp) f32
        yn = y * sc_ref[...] + sh_ref[...]                              # folded BatchNorm
        act = 0.5 * yn * (1.0 + jax.lax.erf(yn * INV_SQRT2))            # exact GELU (f32)
        z = jnp.einsum('bnd,de->bne', act.astype(jnp.bfloat16), w2_ref[...],
                       preferred_element_type=jnp.float32) + b2_ref[...]
        r = y + z
        r4 = r.reshape(B, tile_n // POOL, POOL, Dp)
        r0 = r4[:, :, 0, :]
        r1 = r4[:, :, 1, :]
        d = r0 - r1
        w = 1.0 / (1.0 + jnp.exp(-2.0 * d))       # softmax over a window of 2 == sigmoid
        o_ref[...] = (r1 + w * d).astype(o_ref.dtype)

    def full(shape):
        return pl.BlockSpec(shape, lambda i, _n=len(shape): (0,) * _n)

    ysum, ysq = pl.pallas_call(
        stats_kernel,
        out_shape=(jax.ShapeDtypeStruct((1, Dp), jnp.float32),
                   jax.ShapeDtypeStruct((1, Dp), jnp.float32)),
        grid=(num_tiles,),
        in_specs=[full((B, Np, Cin)), full((K_TAPS * Cin, Dp)), full((1, Dp))],
        out_specs=[full((1, Dp)), full((1, Dp))],
        compiler_params=pltpu.CompilerParams(
            dimension_semantics=("arbitrary",),
            vmem_limit_bytes=VMEM_LIMIT_BYTES),
    )(xp, w1, b1)

    # Fold BN (batch stats over (B, N)) into one scale/shift per channel (tiny XLA ops).
    cnt = jnp.float32(B * N)
    mean = ysum / cnt
    var = jnp.maximum(ysq / cnt - mean * mean, 0.0)    # clamp: E[y^2]-mean^2 cancellation guard
    scale = gamma * jax.lax.rsqrt(var + BN_EPS)
    shift = beta - mean * scale

    out = pl.pallas_call(
        apply_kernel,
        out_shape=jax.ShapeDtypeStruct((B, N // POOL, Dp), jnp.float32),
        grid=(num_tiles,),
        in_specs=[full((B, Np, Cin)), full((K_TAPS * Cin, Dp)), full((1, Dp)),
                  full((1, Dp)), full((1, Dp)), full((Dp, Dp)), full((1, Dp))],
        out_specs=pl.BlockSpec((B, tile_n // POOL, Dp), lambda i: (0, i, 0)),
        compiler_params=pltpu.CompilerParams(
            dimension_semantics=("parallel",),
            vmem_limit_bytes=VMEM_LIMIT_BYTES),
    )(xp, w1, b1, scale, shift, w2, b2)

    # strip channel padding, back to PyTorch channel-first layout (B, D, N//2)
    return jnp.transpose(out[:, :, :D], (0, 2, 1))


def stem_reference(x, p):
    """Plain-JAX f32 reference in the PyTorch NCW layout (matches the nn.Module)."""
    w1 = jnp.transpose(p['w1'], (2, 1, 0))                        # (D, 4, 15)  OIH
    y = jax.lax.conv_general_dilated(
        x, w1, window_strides=(1,), padding=((PAD, PAD),),
        dimension_numbers=('NCH', 'OIH', 'NCH'))
    y = y + p['b1'][None, :, None]
    mean = jnp.mean(y, axis=(0, 2), keepdims=True)
    var = jnp.mean((y - mean) ** 2, axis=(0, 2), keepdims=True)   # biased variance
    yn = (y - mean) / jnp.sqrt(var + BN_EPS)
    yn = yn * p['gamma'][None, :, None] + p['beta'][None, :, None]
    act = 0.5 * yn * (1.0 + jax.lax.erf(yn * INV_SQRT2))
    z = jnp.einsum('ed,bdn->ben', p['w2t'].T, act) + p['b2'][None, :, None]
    r = y + z
    B, D, N = r.shape
    r4 = r.reshape(B, D, N // POOL, POOL)
    attn = jax.nn.softmax(2.0 * r4, axis=-1)
    return jnp.sum(r4 * attn, axis=-1)


if __name__ == "__main__":
    key = jax.random.PRNGKey(0)
    ks = jax.random.split(key, 7)
    B, Cin, N, D = 2, 4, 64, 32        # half_dim = 32; N=64 with tile_n=16 -> 4-step grid

    params = {
        'w1':    jax.random.normal(ks[0], (K_TAPS, Cin, D), jnp.float32) / math.sqrt(Cin * K_TAPS),
        'b1':    0.1 * jax.random.normal(ks[1], (D,), jnp.float32),
        'gamma': 1.0 + 0.1 * jax.random.normal(ks[2], (D,), jnp.float32),
        'beta':  0.1 * jax.random.normal(ks[3], (D,), jnp.float32),
        'w2t':   jax.random.normal(ks[4], (D, D), jnp.float32) / math.sqrt(D),   # (in, out)
        'b2':    0.1 * jax.random.normal(ks[5], (D,), jnp.float32),
    }
    x = jax.random.normal(ks[6], (B, Cin, N), jnp.float32)

    out = jax.block_until_ready(stem_forward(x, params, tile_n=16))
    ref = jax.block_until_ready(stem_reference(x, params))

    assert out.shape == (B, D, N // POOL)
    # tolerance accounts for bf16 MXU operands (f32 accumulation) vs the pure-f32 reference
    np.testing.assert_allclose(np.asarray(out), np.asarray(ref), rtol=5e-2, atol=5e-2)
    print("KERNEL_OK")
</pallas_src>

<mosaic_0001>
module attributes {stable_mosaic.version = 11 : i64} {
  func.func @stats_kernel(%arg0: i32, %arg1: memref<2x78x4xf32, #tpu.memory_space<vmem>>, %arg2: memref<60x128xbf16, #tpu.memory_space<vmem>>, %arg3: memref<1x128xf32, #tpu.memory_space<vmem>>, %arg4: memref<1x128xf32, #tpu.memory_space<vmem>>, %arg5: memref<1x128xf32, #tpu.memory_space<vmem>>) attributes {dimension_semantics = [#tpu.dimension_semantics<arbitrary>], iteration_bounds = array<i64: 4>, scalar_prefetch = 0 : i64, scratch_operands = 0 : i64, tpu.core_type = #tpu.core_type<tc>, window_params = [{pipeline_mode = #tpu.pipeline_mode<synchronous>, transform_indices = @transform_0, window_bounds = array<i64: 2, 78, 4>}, {pipeline_mode = #tpu.pipeline_mode<synchronous>, transform_indices = @transform_1, window_bounds = array<i64: 60, 128>}, {pipeline_mode = #tpu.pipeline_mode<synchronous>, transform_indices = @transform_2, window_bounds = array<i64: 1, 128>}, {pipeline_mode = #tpu.pipeline_mode<synchronous>, transform_indices = @transform_3, window_bounds = array<i64: 1, 128>}, {pipeline_mode = #tpu.pipeline_mode<synchronous>, transform_indices = @transform_4, window_bounds = array<i64: 1, 128>}]} {
    %c0_i32 = arith.constant 0 : i32
    %0 = arith.cmpi eq, %arg0, %c0_i32 : i32
    %1 = arith.extui %0 : i1 to i32
    %c0_i32_0 = arith.constant 0 : i32
    %2 = arith.cmpi ne, %1, %c0_i32_0 : i32
    scf.if %2 {
      %cst_16 = arith.constant 0.000000e+00 : f32
      %41 = vector.broadcast %cst_16 : f32 to vector<1x128xf32>
      %c0_17 = arith.constant 0 : index
      %c0_18 = arith.constant 0 : index
      %42 = vector.load %arg4[%c0_17, %c0_18] : memref<1x128xf32, #tpu.memory_space<vmem>>, vector<1x128xf32>
      tpu.vector_store %arg4[%c0_17, %c0_18], %41 {strides = array<i32>} : memref<1x128xf32, #tpu.memory_space<vmem>>, vector<1x128xf32>,
      %cst_19 = arith.constant 0.000000e+00 : f32
      %43 = vector.broadcast %cst_19 : f32 to vector<1x128xf32>
      %c0_20 = arith.constant 0 : index
      %c0_21 = arith.constant 0 : index
      %44 = vector.load %arg5[%c0_20, %c0_21] : memref<1x128xf32, #tpu.memory_space<vmem>>, vector<1x128xf32>
      tpu.vector_store %arg5[%c0_20, %c0_21], %43 {strides = array<i32>} : memref<1x128xf32, #tpu.memory_space<vmem>>, vector<1x128xf32>,
    } else {
    }
    %c16_i32 = arith.constant 16 : i32
    %3 = arith.muli %arg0, %c16_i32 : i32
    %4 = tpu.assume_multiple %3, 8 : i32
    %c0 = arith.constant 0 : index
    %5 = arith.index_cast %4 : i32 to index
    %c0_1 = arith.constant 0 : index
    %6 = vector.load %arg1[%c0, %5, %c0_1] : memref<2x78x4xf32, #tpu.memory_space<vmem>>, vector<2x30x4xf32>
    %7 = vector.extract_strided_slice %6 {offsets = [0, 0, 0], sizes = [2, 16, 4], strides = [1, 1, 1]} : vector<2x30x4xf32> to vector<2x16x4xf32>
    %8 = vector.extract_strided_slice %6 {offsets = [0, 1, 0], sizes = [2, 16, 4], strides = [1, 1, 1]} : vector<2x30x4xf32> to vector<2x16x4xf32>
    %9 = vector.extract_strided_slice %6 {offsets = [0, 2, 0], sizes = [2, 16, 4], strides = [1, 1, 1]} : vector<2x30x4xf32> to vector<2x16x4xf32>
    %10 = vector.extract_strided_slice %6 {offsets = [0, 3, 0], sizes = [2, 16, 4], strides = [1, 1, 1]} : vector<2x30x4xf32> to vector<2x16x4xf32>
    %11 = vector.extract_strided_slice %6 {offsets = [0, 4, 0], sizes = [2, 16, 4], strides = [1, 1, 1]} : vector<2x30x4xf32> to vector<2x16x4xf32>
    %12 = vector.extract_strided_slice %6 {offsets = [0, 5, 0], sizes = [2, 16, 4], strides = [1, 1, 1]} : vector<2x30x4xf32> to vector<2x16x4xf32>
    %13 = vector.extract_strided_slice %6 {offsets = [0, 6, 0], sizes = [2, 16, 4], strides = [1, 1, 1]} : vector<2x30x4xf32> to vector<2x16x4xf32>
    %14 = vector.extract_strided_slice %6 {offsets = [0, 7, 0], sizes = [2, 16, 4], strides = [1, 1, 1]} : vector<2x30x4xf32> to vector<2x16x4xf32>
    %15 = vector.extract_strided_slice %6 {offsets = [0, 8, 0], sizes = [2, 16, 4], strides = [1, 1, 1]} : vector<2x30x4xf32> to vector<2x16x4xf32>
    %16 = vector.extract_strided_slice %6 {offsets = [0, 9, 0], sizes = [2, 16, 4], strides = [1, 1, 1]} : vector<2x30x4xf32> to vector<2x16x4xf32>
    %17 = vector.extract_strided_slice %6 {offsets = [0, 10, 0], sizes = [2, 16, 4], strides = [1, 1, 1]} : vector<2x30x4xf32> to vector<2x16x4xf32>
    %18 = vector.extract_strided_slice %6 {offsets = [0, 11, 0], sizes = [2, 16, 4], strides = [1, 1, 1]} : vector<2x30x4xf32> to vector<2x16x4xf32>
    %19 = vector.extract_strided_slice %6 {offsets = [0, 12, 0], sizes = [2, 16, 4], strides = [1, 1, 1]} : vector<2x30x4xf32> to vector<2x16x4xf32>
    %20 = vector.extract_strided_slice %6 {offsets = [0, 13, 0], sizes = [2, 16, 4], strides = [1, 1, 1]} : vector<2x30x4xf32> to vector<2x16x4xf32>
    %21 = vector.extract_strided_slice %6 {offsets = [0, 14, 0], sizes = [2, 16, 4], strides = [1, 1, 1]} : vector<2x30x4xf32> to vector<2x16x4xf32>
    %22 = tpu.concatenate %7, %8, %9, %10, %11, %12, %13, %14, %15, %16, %17, %18, %19, %20, %21 in 2 : vector<2x16x4xf32>, vector<2x16x4xf32>, vector<2x16x4xf32>, vector<2x16x4xf32>, vector<2x16x4xf32>, vector<2x16x4xf32>, vector<2x16x4xf32>, vector<2x16x4xf32>, vector<2x16x4xf32>, vector<2x16x4xf32>, vector<2x16x4xf32>, vector<2x16x4xf32>, vector<2x16x4xf32>, vector<2x16x4xf32>, vector<2x16x4xf32> -> vector<2x16x60xf32>
    %23 = arith.truncf %22 : vector<2x16x60xf32> to vector<2x16x60xbf16>
    %c0_2 = arith.constant 0 : index
    %c0_3 = arith.constant 0 : index
    %24 = vector.load %arg2[%c0_2, %c0_3] : memref<60x128xbf16, #tpu.memory_space<vmem>>, vector<60x128xbf16>
    "tpu.trace_start"() <{level = 10 : i32, message = "bnc,cd->bnd"}> : () -> ()
    %cst = arith.constant dense<0.000000e+00> : vector<2x16x128xf32>
    %25 = tpu.matmul %23, %24, %cst {dimension_numbers = #tpu.dot_dimension_numbers<[2], [0], [0, 1], [1], [0, 0, 0, 1, 1, 1], [], []>} : vector<2x16x60xbf16>, vector<60x128xbf16>, vector<2x16x128xf32> -> vector<2x16x128xf32>
    "tpu.trace_stop"() : () -> ()
    %c0_4 = arith.constant 0 : index
    %c0_5 = arith.constant 0 : index
    %26 = vector.load %arg3[%c0_4, %c0_5] : memref<1x128xf32, #tpu.memory_space<vmem>>, vector<1x128xf32>
    %27 = vector.shape_cast %26 : vector<1x128xf32> to vector<1x1x128xf32>
    %28 = vector.broadcast %27 : vector<1x1x128xf32> to vector<2x16x128xf32>
    %29 = arith.addf %25, %28 : vector<2x16x128xf32>
    %c0_6 = arith.constant 0 : index
    %c0_7 = arith.constant 0 : index
    %30 = vector.load %arg4[%c0_6, %c0_7] : memref<1x128xf32, #tpu.memory_space<vmem>>, vector<1x128xf32>
    %cst_8 = arith.constant dense<0.000000e+00> : vector<128xf32>
    %31 = vector.multi_reduction <add>, %29, %cst_8 [0, 1] : vector<2x16x128xf32> to vector<128xf32>
    %32 = vector.shape_cast %31 : vector<128xf32> to vector<1x128xf32>
    %33 = arith.addf %30, %32 : vector<1x128xf32>
    %c0_9 = arith.constant 0 : index
    %c0_10 = arith.constant 0 : index
    %34 = vector.load %arg4[%c0_9, %c0_10] : memref<1x128xf32, #tpu.memory_space<vmem>>, vector<1x128xf32>
    tpu.vector_store %arg4[%c0_9, %c0_10], %33 {strides = array<i32>} : memref<1x128xf32, #tpu.memory_space<vmem>>, vector<1x128xf32>,
    %c0_11 = arith.constant 0 : index
    %c0_12 = arith.constant 0 : index
    %35 = vector.load %arg5[%c0_11, %c0_12] : memref<1x128xf32, #tpu.memory_space<vmem>>, vector<1x128xf32>
    %36 = arith.mulf %29, %29 : vector<2x16x128xf32>
    %cst_13 = arith.constant dense<0.000000e+00> : vector<128xf32>
    %37 = vector.multi_reduction <add>, %36, %cst_13 [0, 1] : vector<2x16x128xf32> to vector<128xf32>
    %38 = vector.shape_cast %37 : vector<128xf32> to vector<1x128xf32>
    %39 = arith.addf %35, %38 : vector<1x128xf32>
    %c0_14 = arith.constant 0 : index
    %c0_15 = arith.constant 0 : index
    %40 = vector.load %arg5[%c0_14, %c0_15] : memref<1x128xf32, #tpu.memory_space<vmem>>, vector<1x128xf32>
    tpu.vector_store %arg5[%c0_14, %c0_15], %39 {strides = array<i32>} : memref<1x128xf32, #tpu.memory_space<vmem>>, vector<1x128xf32>,
    return
  }
  func.func @transform_0(%arg0: i32) -> (i32, i32, i32) {
    %c0_i32 = arith.constant 0 : i32
    %c0_i32_0 = arith.constant 0 : i32
    %c0_i32_1 = arith.constant 0 : i32
    %c0_i32_2 = arith.constant 0 : i32
    return %c0_i32, %c0_i32_0, %c0_i32_1 : i32, i32, i32
  }
  func.func @transform_1(%arg0: i32) -> (i32, i32) {
    %c0_i32 = arith.constant 0 : i32
    %c0_i32_0 = arith.constant 0 : i32
    %c0_i32_1 = arith.constant 0 : i32
    return %c0_i32, %c0_i32_0 : i32, i32
  }
  func.func @transform_2(%arg0: i32) -> (i32, i32) {
    %c0_i32 = arith.constant 0 : i32
    %c0_i32_0 = arith.constant 0 : i32
    %c0_i32_1 = arith.constant 0 : i32
    return %c0_i32, %c0_i32_0 : i32, i32
  }
  func.func @transform_3(%arg0: i32) -> (i32, i32) {
    %c0_i32 = arith.constant 0 : i32
    %c0_i32_0 = arith.constant 0 : i32
    %c0_i32_1 = arith.constant 0 : i32
    return %c0_i32, %c0_i32_0 : i32, i32
  }
  func.func @transform_4(%arg0: i32) -> (i32, i32) {
    %c0_i32 = arith.constant 0 : i32
    %c0_i32_0 = arith.constant 0 : i32
    %c0_i32_1 = arith.constant 0 : i32
    return %c0_i32, %c0_i32_0 : i32, i32
  }
}

</mosaic_0001>

<llo_original>
// kernel: tpu_custom_call.1
$region0: #{tpu_custom_call.1}
  #allocation0 [shape = 'u32[]', space=smem, size = 0x4, offset = 0x4, fixed_abs, tag = 'smem constant byte address 0x4 - core index']
  #allocation1 [shape = 'u32[72,128]{1,0:T(1,128)}', space=vmem, size = 0x9000, scoped, tag = 'internal scratch']
  %s0 = inlined_call_operand.vmem [shape: f32[2,78,4], index: 0, kind: input, shape index: {}]
  %s1 = inlined_call_operand.vmem [shape: bf16[60,128], index: 1, kind: input, shape index: {}]
  %s2 = inlined_call_operand.vmem [shape: f32[1,128], index: 2, kind: input, shape index: {}]
  %s3 = inlined_call_operand.hbm [shape: f32[1,128], index: 3, kind: output, shape index: {0}]
  %s4 = inlined_call_operand.hbm [shape: f32[1,128], index: 4, kind: output, shape index: {1}]
  %5 = xla_tuple %s3, %s4
  %s6 = sld [smem:[#allocation0]]
  $region57: #{tpu_custom_call.1} parent=0
    _
  %s8 = ssub.s32 1, %s6
  %s9 = scalar_select 0, %s8, %s6
  $region1: #{tpu_custom_call.1} parent=0
    #allocation2 [shape = 'u8[512]{0}', space=vmem, size = 0x400, scoped, tag = 'output window, operand 0, single buffered']
    #allocation3 [shape = 's32[2]{0}', space=sflag, size = 0x8, scoped, tag = 'scoped memory for tpu_custom_call.1']
    #allocation4 [shape = 'u8[512]{0}', space=vmem, size = 0x400, scoped, tag = 'output window, operand 1, single buffered']
    #allocation5 [shape = 's32[1]{0}', space=sflag, size = 0x4, scoped, tag = 'scoped memory for tpu_custom_call.1']
    %10 = vsyncpa [#allocation3], 0
    %11 = vsyncpa [#allocation5], 0
    loop: start=0, step=1, limit=6
    $region2: #{tpu_custom_call.1} parent=1 // loop_pre_header
      _
    $region3: #{tpu_custom_call.1} parent=1 // loop_header
      %s13 = sphi 0, %s17
      %p14 = scmp.ge.s32.totalorder %s13, 6
      %s21 = sphi 0, %s21
      %s23 = sphi 0, %s21
      %s24 = sphi 0, %s23
      %s38 = sphi 0, %s24
      %s42 = sphi 0, %s42
      %s44 = sphi 0, %s42
      %s45 = sphi 0, %s44
      %s59 = sphi 0, %s45
      %s63 = sphi 0, %s63
      %s65 = sphi 0, %s63
      %s66 = sphi 0, %s65
      %s80 = sphi 0, %s66
      %s84 = sphi 0, %s84
      %s86 = sphi 0, %s84
      %s87 = sphi 0, %s86
      %s101 = sphi 0, %s87
      %s105 = sphi 0, %s105
      %s107 = sphi 0, %s105
      %s108 = sphi 0, %s107
      %s122 = sphi 0, %s108
    $region4: #{tpu_custom_call.1} parent=1 // loop_header_branch
      %16 = sbr.rel (%p14) target = $region8
    $region5: #{tpu_custom_call.1} parent=1 // loop_body
      %s18 = ssub.s32 %s13, 1
      %s19 = ssub.s32 %s13, 2
      %s20 = sadd.s32 %s13, 1
      %s22 = sadd.s32 %s21, 1
      %p25 = scmp.eq.s32.totalorder %s13, 3
      %p26 = scmp.ne.s32.totalorder %s21, %s23
      %p27 = scmp.eq.s32.totalorder %s13, 0
      %p28 = por %p26, %p27
      %p29 = scmp.ne.s32.totalorder %s21, %s23
      %p30 = scmp.eq.s32.totalorder %s18, 3
      %p31 = por %p29, %p30
      %p32 = scmp.ne.s32.totalorder %s23, %s24
      %p33 = scmp.eq.s32.totalorder %s18, 0
      %p34 = por %p32, %p33
      %p35 = scmp.ne.s32.totalorder %s23, %s24
      %p36 = scmp.eq.s32.totalorder %s19, 3
      %p37 = por %p35, %p36
      %p39 = scmp.ne.s32.totalorder %s24, %s38
      %p40 = scmp.eq.s32.totalorder %s19, 0
      %p41 = por %p39, %p40
      %s43 = sadd.s32 %s42, 1
      %p46 = scmp.eq.s32.totalorder %s13, 3
      %p47 = scmp.ne.s32.totalorder %s42, %s44
      %p48 = scmp.eq.s32.totalorder %s13, 0
      %p49 = por %p47, %p48
      %p50 = scmp.ne.s32.totalorder %s42, %s44
      %p51 = scmp.eq.s32.totalorder %s18, 3
      %p52 = por %p50, %p51
      %p53 = scmp.ne.s32.totalorder %s44, %s45
      %p54 = scmp.eq.s32.totalorder %s18, 0
      %p55 = por %p53, %p54
      %p56 = scmp.ne.s32.totalorder %s44, %s45
      %p57 = scmp.eq.s32.totalorder %s19, 3
      %p58 = por %p56, %p57
      %p60 = scmp.ne.s32.totalorder %s45, %s59
      %p61 = scmp.eq.s32.totalorder %s19, 0
      %p62 = por %p60, %p61
      %s64 = sadd.s32 %s63, 1
      %p67 = scmp.eq.s32.totalorder %s13, 3
      %p68 = scmp.ne.s32.totalorder %s63, %s65
      %p69 = scmp.eq.s32.totalorder %s13, 0
      %p70 = por %p68, %p69
      %p71 = scmp.ne.s32.totalorder %s63, %s65
      %p72 = scmp.eq.s32.totalorder %s18, 3
      %p73 = por %p71, %p72
      %p74 = scmp.ne.s32.totalorder %s65, %s66
      %p75 = scmp.eq.s32.totalorder %s18, 0
      %p76 = por %p74, %p75
      %p77 = scmp.ne.s32.totalorder %s65, %s66
      %p78 = scmp.eq.s32.totalorder %s19, 3
      %p79 = por %p77, %p78
      %p81 = scmp.ne.s32.totalorder %s66, %s80
      %p82 = scmp.eq.s32.totalorder %s19, 0
      %p83 = por %p81, %p82
      %s85 = sadd.s32 %s84, 1
      %p88 = scmp.eq.s32.totalorder %s13, 3
      %p89 = scmp.ne.s32.totalorder %s84, %s86
      %p90 = scmp.eq.s32.totalorder %s13, 0
      %p91 = por %p89, %p90
      %p92 = scmp.ne.s32.totalorder %s84, %s86
      %p93 = scmp.eq.s32.totalorder %s18, 3
      %p94 = por %p92, %p93
      %p95 = scmp.ne.s32.totalorder %s86, %s87
      %p96 = scmp.eq.s32.totalorder %s18, 0
      %p97 = por %p95, %p96
      %p98 = scmp.ne.s32.totalorder %s86, %s87
      %p99 = scmp.eq.s32.totalorder %s19, 3
      %p100 = por %p98, %p99
      %p102 = scmp.ne.s32.totalorder %s87, %s101
      %p103 = scmp.eq.s32.totalorder %s19, 0
      %p104 = por %p102, %p103
      %s106 = sadd.s32 %s105, 1
      %p109 = scmp.eq.s32.totalorder %s13, 3
      %p110 = scmp.ne.s32.totalorder %s105, %s107
      %p111 = scmp.eq.s32.totalorder %s13, 0
      %p112 = por %p110, %p111
      %p113 = scmp.ne.s32.totalorder %s105, %s107
      %p114 = scmp.eq.s32.totalorder %s18, 3
      %p115 = por %p113, %p114
      %p116 = scmp.ne.s32.totalorder %s107, %s108
      %p117 = scmp.eq.s32.totalorder %s18, 0
      %p118 = por %p116, %p117
      %p119 = scmp.ne.s32.totalorder %s107, %s108
      %p120 = scmp.eq.s32.totalorder %s19, 3
      %p121 = por %p119, %p120
      %p123 = scmp.ne.s32.totalorder %s108, %s122
      %p124 = scmp.eq.s32.totalorder %s19, 0
      %p125 = por %p123, %p124
      %p126 = scmp.le.s32.totalorder 1, %s13
      %p127 = scmp.lt.s32.totalorder %s13, 5
      %p128 = pnand %p126, %p127
      %p129 = pneg %p128
      // Predicated region
      $region9: #{tpu_custom_call.1} parent=5 // pred_check
        _
      $region10: #{tpu_custom_call.1} parent=5 // pred_check_branch
        %131 = sbr.rel (%p128) target = $region12
      $region11: #{tpu_custom_call.1} parent=5 // pred_region
        %s132 = ssub.s32 %s13, 1
        // Predicated region
        $region13: #{tpu_custom_call.1} parent=11 // pred_check
          %p133 = pneg %p34
        $region14: #{tpu_custom_call.1} parent=11 // pred_check_branch
          %135 = sbr.rel (%p133) target = $region16
        $region15: #{tpu_custom_call.1} parent=11 // pred_region
          _
        $region16: #{tpu_custom_call.1} parent=11 // pred_fallthru
          _
        // Predicated region
        $region17: #{tpu_custom_call.1} parent=11 // pred_check
          %p136 = pneg %p55
        $region18: #{tpu_custom_call.1} parent=11 // pred_check_branch
          %138 = sbr.rel (%p136) target = $region20
        $region19: #{tpu_custom_call.1} parent=11 // pred_region
          _
        $region20: #{tpu_custom_call.1} parent=11 // pred_fallthru
          _
        // Predicated region
        $region21: #{tpu_custom_call.1} parent=11 // pred_check
          %p139 = pneg %p76
        $region22: #{tpu_custom_call.1} parent=11 // pred_check_branch
          %141 = sbr.rel (%p139) target = $region24
        $region23: #{tpu_custom_call.1} parent=11 // pred_region
          _
        $region24: #{tpu_custom_call.1} parent=11 // pred_fallthru
          _
      $region12: #{tpu_custom_call.1} parent=5 // pred_fallthru
        _
      %p142 = scmp.lt.s32.totalorder %s13, 4
      // Predicated region
      $region25: #{tpu_custom_call.1} parent=5 // pred_check
        %p143 = pneg %p142
      $region26: #{tpu_custom_call.1} parent=5 // pred_check_branch
        %145 = sbr.rel (%p143) target = $region28
      $region27: #{tpu_custom_call.1} parent=5 // pred_region
        _
      $region28: #{tpu_custom_call.1} parent=5 // pred_fallthru
        _
      %p146 = scmp.le.s32.totalorder 1, %s13
      %p147 = scmp.lt.s32.totalorder %s13, 5
      %p148 = pnand %p146, %p147
      %p149 = pneg %p148
      // Predicated region
      $region29: #{tpu_custom_call.1} parent=5 // pred_check
        _
      $region30: #{tpu_custom_call.1} parent=5 // pred_check_branch
        %151 = sbr.rel (%p148) target = $region32
      $region31: #{tpu_custom_call.1} parent=5 // pred_region
        %s152 = ssub.s32 %s13, 1
        %p153 = pneg %p34
        %p154 = pneg %p31
        %p155 = pneg %p55
        %p156 = pneg %p52
        %p157 = pneg %p76
        %p158 = pneg %p73
        %p159 = pneg %p97
        %p160 = pneg %p94
        %p161 = pneg %p118
        %p162 = pneg %p115
        %p164 = scmp.eq.s32.totalorder %s18, 0
        // Predicated region
        $region33: #{tpu_custom_call.1} parent=31 // pred_check
          %p165 = pneg %p164
        $region34: #{tpu_custom_call.1} parent=31 // pred_check_branch
          %167 = sbr.rel (%p165) target = $region36
        $region35: #{tpu_custom_call.1} parent=31 // pred_region
          %168 = vst [vmem:[#allocation2] sm:$0x1] 0.0
          %169 = vst [vmem:[#allocation4] sm:$0x1] 0.0
        $region36: #{tpu_custom_call.1} parent=31 // pred_fallthru
          _
        %s170 = smul.u32 %s18, 16
        %s171 = scalar_lea.vmem %s0, %s170
        %v172 = vld [vmem:[%s171] sm:$0xff]
        %v173 = vld [vmem:[%s171 + $0x8] sm:$0xff]
        %v174 = vld [vmem:[%s171 + $0x10] sm:$0xff]
        %v175 = vld [vmem:[%s171 + $0x18] sm:$0x3f]
        %v176 = vld [vmem:[%s171 + $0x50] sm:$0xff]
        %v177 = vld [vmem:[%s171 + $0x58] sm:$0xff]
        %v178 = vld [vmem:[%s171 + $0x60] sm:$0xff]
        %v179 = vld [vmem:[%s171 + $0x68] sm:$0x3f]
        %vm186 = vcmask 1046528
        %v187 = vrot.slane %v172, 1
        %v188 = vrot.slane %v173, 1
        %v189 = vsel %vm186, %v187, %v188
        %v190 = vrot.slane %v174, 1
        %v191 = vsel %vm186, %v188, %v190
        %v192 = vrot.slane %v176, 1
        %v193 = vrot.slane %v177, 1
        %v194 = vsel %vm186, %v192, %v193
        %v195 = vrot.slane %v178, 1
        %v196 = vsel %vm186, %v193, %v195
        %197 = vrot.lane.b32.xlu0 %v189, 4
        %v198 = vpop.permute.xlu0 %197
        %199 = vrot.lane.b32.xlu0 %v191, 4
        %v200 = vpop.permute.xlu0 %199
        %201 = vrot.lane.b32.xlu0 %v194, 4
        %v202 = vpop.permute.xlu0 %201
        %203 = vrot.lane.b32.xlu0 %v196, 4
        %v204 = vpop.permute.xlu0 %203
        %vm209 = vcmask 1045504
        %v210 = vrot.slane %v172, 2
        %v211 = vrot.slane %v173, 2
        %v212 = vsel %vm209, %v210, %v211
        %v213 = vrot.slane %v174, 2
        %v214 = vsel %vm209, %v211, %v213
        %v215 = vrot.slane %v176, 2
        %v216 = vrot.slane %v177, 2
        %v217 = vsel %vm209, %v215, %v216
        %v218 = vrot.slane %v178, 2
        %v219 = vsel %vm209, %v216, %v218
        %220 = vrot.lane.b32.xlu0 %v212, 8
        %v221 = vpop.permute.xlu0 %220
        %222 = vrot.lane.b32.xlu0 %v214, 8
        %v223 = vpop.permute.xlu0 %222
        %224 = vrot.lane.b32.xlu0 %v217, 8
        %v225 = vpop.permute.xlu0 %224
        %226 = vrot.lane.b32.xlu0 %v219, 8
        %v227 = vpop.permute.xlu0 %226
        %vm232 = vcmask 1044480
        %v233 = vrot.slane %v172, 3
        %v234 = vrot.slane %v173, 3
        %v235 = vsel %vm232, %v233, %v234
        %v236 = vrot.slane %v174, 3
        %v237 = vsel %vm232, %v234, %v236
        %v238 = vrot.slane %v176, 3
        %v239 = vrot.slane %v177, 3
        %v240 = vsel %vm232, %v238, %v239
        %v241 = vrot.slane %v178, 3
        %v242 = vsel %vm232, %v239, %v241
        %243 = vrot.lane.b32.xlu0 %v235, 12
        %v244 = vpop.permute.xlu0 %243
        %245 = vrot.lane.b32.xlu0 %v237, 12
        %v246 = vpop.permute.xlu0 %245
        %247 = vrot.lane.b32.xlu0 %v240, 12
        %v248 = vpop.permute.xlu0 %247
        %249 = vrot.lane.b32.xlu0 %v242, 12
        %v250 = vpop.permute.xlu0 %249
        %vm255 = vcmask 1043456
        %v256 = vrot.slane %v172, 4
        %v257 = vrot.slane %v173, 4
        %v258 = vsel %vm255, %v256, %v257
        %v259 = vrot.slane %v174, 4
        %v260 = vsel %vm255, %v257, %v259
        %v261 = vrot.slane %v176, 4
        %v262 = vrot.slane %v177, 4
        %v263 = vsel %vm255, %v261, %v262
        %v264 = vrot.slane %v178, 4
        %v265 = vsel %vm255, %v262, %v264
        %266 = vrot.lane.b32.xlu0 %v258, 16
        %v267 = vpop.permute.xlu0 %266
        %268 = vrot.lane.b32.xlu0 %v260, 16
        %v269 = vpop.permute.xlu0 %268
        %270 = vrot.lane.b32.xlu0 %v263, 16
        %v271 = vpop.permute.xlu0 %270
        %272 = vrot.lane.b32.xlu0 %v265, 16
        %v273 = vpop.permute.xlu0 %272
        %vm278 = vcmask 1042432
        %v279 = vrot.slane %v172, 5
        %v280 = vrot.slane %v173, 5
        %v281 = vsel %vm278, %v279, %v280
        %v282 = vrot.slane %v174, 5
        %v283 = vsel %vm278, %v280, %v282
        %v284 = vrot.slane %v176, 5
        %v285 = vrot.slane %v177, 5
        %v286 = vsel %vm278, %v284, %v285
        %v287 = vrot.slane %v178, 5
        %v288 = vsel %vm278, %v285, %v287
        %289 = vrot.lane.b32.xlu0 %v281, 20
        %v290 = vpop.permute.xlu0 %289
        %291 = vrot.lane.b32.xlu0 %v283, 20
        %v292 = vpop.permute.xlu0 %291
        %293 = vrot.lane.b32.xlu0 %v286, 20
        %v294 = vpop.permute.xlu0 %293
        %295 = vrot.lane.b32.xlu0 %v288, 20
        %v296 = vpop.permute.xlu0 %295
        %vm301 = vcmask 1041408
        %v302 = vrot.slane %v172, 6
        %v303 = vrot.slane %v173, 6
        %v304 = vsel %vm301, %v302, %v303
        %v305 = vrot.slane %v174, 6
        %v306 = vsel %vm301, %v303, %v305
        %v307 = vrot.slane %v176, 6
        %v308 = vrot.slane %v177, 6
        %v309 = vsel %vm301, %v307, %v308
        %v310 = vrot.slane %v178, 6
        %v311 = vsel %vm301, %v308, %v310
        %312 = vrot.lane.b32.xlu0 %v304, 24
        %v313 = vpop.permute.xlu0 %312
        %314 = vrot.lane.b32.xlu0 %v306, 24
        %v315 = vpop.permute.xlu0 %314
        %316 = vrot.lane.b32.xlu0 %v309, 24
        %v317 = vpop.permute.xlu0 %316
        %318 = vrot.lane.b32.xlu0 %v311, 24
        %v319 = vpop.permute.xlu0 %318
        %vm324 = vcmask 1040384
        %v325 = vrot.slane %v172, 7
        %v326 = vrot.slane %v173, 7
        %v327 = vsel %vm324, %v325, %v326
        %v328 = vrot.slane %v174, 7
        %v329 = vsel %vm324, %v326, %v328
        %v330 = vrot.slane %v176, 7
        %v331 = vrot.slane %v177, 7
        %v332 = vsel %vm324, %v330, %v331
        %v333 = vrot.slane %v178, 7
        %v334 = vsel %vm324, %v331, %v333
        %335 = vrot.lane.b32.xlu0 %v327, 28
        %v336 = vpop.permute.xlu0 %335
        %337 = vrot.lane.b32.xlu0 %v329, 28
        %v338 = vpop.permute.xlu0 %337
        %339 = vrot.lane.b32.xlu0 %v332, 28
        %v340 = vpop.permute.xlu0 %339
        %341 = vrot.lane.b32.xlu0 %v334, 28
        %v342 = vpop.permute.xlu0 %341
        %347 = vrot.lane.b32.xlu0 %v173, 32
        %v348 = vpop.permute.xlu0 %347
        %349 = vrot.lane.b32.xlu0 %v174, 32
        %v350 = vpop.permute.xlu0 %349
        %351 = vrot.lane.b32.xlu0 %v177, 32
        %v352 = vpop.permute.xlu0 %351
        %353 = vrot.lane.b32.xlu0 %v178, 32
        %v354 = vpop.permute.xlu0 %353
        %v361 = vrot.slane %v175, 1
        %v362 = vsel %vm186, %v190, %v361
        %v363 = vrot.slane %v179, 1
        %v364 = vsel %vm186, %v195, %v363
        %365 = vrot.lane.b32.xlu0 %v191, 36
        %v366 = vpop.permute.xlu0 %365
        %367 = vrot.lane.b32.xlu0 %v362, 36
        %v368 = vpop.permute.xlu0 %367
        %369 = vrot.lane.b32.xlu0 %v196, 36
        %v370 = vpop.permute.xlu0 %369
        %371 = vrot.lane.b32.xlu0 %v364, 36
        %v372 = vpop.permute.xlu0 %371
        %v377 = vrot.slane %v175, 2
        %v378 = vsel %vm209, %v213, %v377
        %v379 = vrot.slane %v179, 2
        %v380 = vsel %vm209, %v218, %v379
        %381 = vrot.lane.b32.xlu0 %v214, 40
        %v382 = vpop.permute.xlu0 %381
        %383 = vrot.lane.b32.xlu0 %v378, 40
        %v384 = vpop.permute.xlu0 %383
        %385 = vrot.lane.b32.xlu0 %v219, 40
        %v386 = vpop.permute.xlu0 %385
        %387 = vrot.lane.b32.xlu0 %v380, 40
        %v388 = vpop.permute.xlu0 %387
        %v393 = vrot.slane %v175, 3
        %v394 = vsel %vm232, %v236, %v393
        %v395 = vrot.slane %v179, 3
        %v396 = vsel %vm232, %v241, %v395
        %397 = vrot.lane.b32.xlu0 %v237, 44
        %v398 = vpop.permute.xlu0 %397
        %399 = vrot.lane.b32.xlu0 %v394, 44
        %v400 = vpop.permute.xlu0 %399
        %401 = vrot.lane.b32.xlu0 %v242, 44
        %v402 = vpop.permute.xlu0 %401
        %403 = vrot.lane.b32.xlu0 %v396, 44
        %v404 = vpop.permute.xlu0 %403
        %v409 = vrot.slane %v175, 4
        %v410 = vsel %vm255, %v259, %v409
        %v411 = vrot.slane %v179, 4
        %v412 = vsel %vm255, %v264, %v411
        %413 = vrot.lane.b32.xlu0 %v260, 48
        %v414 = vpop.permute.xlu0 %413
        %415 = vrot.lane.b32.xlu0 %v410, 48
        %v416 = vpop.permute.xlu0 %415
        %417 = vrot.lane.b32.xlu0 %v265, 48
        %v418 = vpop.permute.xlu0 %417
        %419 = vrot.lane.b32.xlu0 %v412, 48
        %v420 = vpop.permute.xlu0 %419
        %v425 = vrot.slane %v175, 5
        %v426 = vsel %vm278, %v282, %v425
        %v427 = vrot.slane %v179, 5
        %v428 = vsel %vm278, %v287, %v427
        %429 = vrot.lane.b32.xlu0 %v283, 52
        %v430 = vpop.permute.xlu0 %429
        %431 = vrot.lane.b32.xlu0 %v426, 52
        %v432 = vpop.permute.xlu0 %431
        %433 = vrot.lane.b32.xlu0 %v288, 52
        %v434 = vpop.permute.xlu0 %433
        %435 = vrot.lane.b32.xlu0 %v428, 52
        %v436 = vpop.permute.xlu0 %435
        %v441 = vrot.slane %v175, 6
        %v442 = vsel %vm301, %v305, %v441
        %v443 = vrot.slane %v179, 6
        %v444 = vsel %vm301, %v310, %v443
        %445 = vrot.lane.b32.xlu0 %v306, 56
        %v446 = vpop.permute.xlu0 %445
        %447 = vrot.lane.b32.xlu0 %v442, 56
        %v448 = vpop.permute.xlu0 %447
        %449 = vrot.lane.b32.xlu0 %v311, 56
        %v450 = vpop.permute.xlu0 %449
        %451 = vrot.lane.b32.xlu0 %v444, 56
        %v452 = vpop.permute.xlu0 %451
        %vm457 = vcmask 31744
        %v458 = vsel %vm457, %v172, %v198
        %v459 = vsel %vm457, %v173, %v200
        %v460 = vsel %vm457, %v176, %v202
        %v461 = vsel %vm457, %v177, %v204
        %vm462 = vcmask 64512
        %v463 = vsel %vm462, %v458, %v221
        %v464 = vsel %vm462, %v459, %v223
        %v465 = vsel %vm462, %v460, %v225
        %v466 = vsel %vm462, %v461, %v227
        %vm467 = vcmask 97280
        %v468 = vsel %vm467, %v463, %v244
        %v469 = vsel %vm467, %v464, %v246
        %v470 = vsel %vm467, %v465, %v248
        %v471 = vsel %vm467, %v466, %v250
        %vm472 = vcmask 130048
        %v473 = vsel %vm472, %v468, %v267
        %v474 = vsel %vm472, %v469, %v269
        %v475 = vsel %vm472, %v470, %v271
        %v476 = vsel %vm472, %v471, %v273
        %vm477 = vcmask 162816
        %v478 = vsel %vm477, %v473, %v290
        %v479 = vsel %vm477, %v474, %v292
        %v480 = vsel %vm477, %v475, %v294
        %v481 = vsel %vm477, %v476, %v296
        %vm482 = vcmask 195584
        %v483 = vsel %vm482, %v478, %v313
        %v484 = vsel %vm482, %v479, %v315
        %v485 = vsel %vm482, %v480, %v317
        %v486 = vsel %vm482, %v481, %v319
        %vm487 = vcmask 228352
        %v488 = vsel %vm487, %v483, %v336
        %v489 = vsel %vm487, %v484, %v338
        %v490 = vsel %vm487, %v485, %v340
        %v491 = vsel %vm487, %v486, %v342
        %vm492 = vcmask 261120
        %v493 = vsel %vm492, %v488, %v348
        %v494 = vsel %vm492, %v489, %v350
        %v495 = vsel %vm492, %v490, %v352
        %v496 = vsel %vm492, %v491, %v354
        %vm497 = vcmask 293888
        %v498 = vsel %vm497, %v493, %v366
        %v499 = vsel %vm497, %v494, %v368
        %v500 = vsel %vm497, %v495, %v370
        %v501 = vsel %vm497, %v496, %v372
        %vm502 = vcmask 326656
        %v503 = vsel %vm502, %v498, %v382
        %v504 = vsel %vm502, %v499, %v384
        %v505 = vsel %vm502, %v500, %v386
        %v506 = vsel %vm502, %v501, %v388
        %vm507 = vcmask 359424
        %v508 = vsel %vm507, %v503, %v398
        %v509 = vsel %vm507, %v504, %v400
        %v510 = vsel %vm507, %v505, %v402
        %v511 = vsel %vm507, %v506, %v404
        %vm512 = vcmask 392192
        %v513 = vsel %vm512, %v508, %v414
        %v514 = vsel %vm512, %v509, %v416
        %v515 = vsel %vm512, %v510, %v418
        %v516 = vsel %vm512, %v511, %v420
        %vm517 = vcmask 424960
        %v518 = vsel %vm517, %v513, %v430
        %v519 = vsel %vm517, %v514, %v432
        %v520 = vsel %vm517, %v515, %v434
        %v521 = vsel %vm517, %v516, %v436
        %vm522 = vcmask 457728
        %v523 = vsel %vm522, %v518, %v446
        %v524 = vsel %vm522, %v519, %v448
        %v525 = vsel %vm522, %v520, %v450
        %v526 = vsel %vm522, %v521, %v452
        %v527 = vpack.c.bf16 %v523, %v523
        %v528 = vpack.c.bf16 %v524, %v524
        %v529 = vpack.c.bf16 %v525, %v525
        %v530 = vpack.c.bf16 %v526, %v526
        %v531 = vld [vmem:[%s1] sm:$0xf]
        %v532 = vld [vmem:[%s1 + $0x4] sm:$0xf]
        %v533 = vld [vmem:[%s1 + $0x8] sm:$0xf]
        %v534 = vld [vmem:[%s1 + $0xc] sm:$0xf]
        %v535 = vld [vmem:[%s1 + $0x10] sm:$0xf]
        %v536 = vld [vmem:[%s1 + $0x14] sm:$0xf]
        %v537 = vld [vmem:[%s1 + $0x18] sm:$0xf]
        %v538 = vld [vmem:[%s1 + $0x1c] sm:$0x3]
        %v539 = vld [vmem:[%s2] sm:$0x1]
        %v541 = vperm.slane %v539, 0
        %v547 = vunpack.c.l.b16 %v527
        %v548 = vunpack.c.l.b16 %v528
        %v549 = vunpack.c.l.b16 %v529
        %v550 = vunpack.c.l.b16 %v530
        %v551 = vpack.c.b16 %v548, %v547
        %v552 = vpack.c.b16 %v550, %v549
        %v561 = vunpack.c.l.b16 %v531
        %v562 = vunpack.c.l.b16 %v532
        %v563 = vunpack.c.l.b16 %v533
        %v564 = vunpack.c.l.b16 %v534
        %v565 = vunpack.c.l.b16 %v535
        %v566 = vunpack.c.l.b16 %v536
        %v567 = vunpack.c.l.b16 %v537
        %v568 = vunpack.c.l.b16 %v538
        %v569 = vpack.c.b16 %v562, %v561
        %v570 = vpack.c.b16 %v564, %v563
        %v571 = vpack.c.b16 %v566, %v565
        %v572 = vpack.c.b16 %v568, %v567
        %vm576 = vcmask 490496
        %v578 = vsel %vm576, %v551, 0
        %v581 = vsel %vm576, %v552, 0
        %v584 = vsel %vm209, %v572, 0
        %586 = vmatpush.bf16.msra.mxu0 0
        %587 = vmatpush.bf16.msra.mxu0 0
        %588 = vmatpush.bf16.msra.mxu0 0
        %589 = vmatpush.bf16.msra.mxu0 0
        %590 = vmatpush.bf16.msra.mxu0 %v584
        %591 = vmatpush.bf16.msra.mxu0 %v571
        %592 = vmatpush.bf16.msra.mxu0 %v570
        %593 = vmatpush.bf16.msra.mxu0 %v569
        %594 = vmatmul.bf16.gmra.mxu0 %v578
        %v595 = vpop.f32.mrf.mxu0
        %v596 = vadd.f32 %v541, %v595
        %v597 = vpop.f32.mrf.mxu0
        %v598 = vadd.f32 %v541, %v597
        %599 = vmatmul.bf16.gmra.mxu0 %v581
        %v600 = vpop.f32.mrf.mxu0
        %v601 = vadd.f32 %v541, %v600
        %v602 = vpop.f32.mrf.mxu0
        %v603 = vadd.f32 %v541, %v602
        %604 = vdwg.mxu0
        %v605 = vld [vmem:[#allocation2] sm:$0x1]
        %v606 = vadd.f32 %v596, %v598
        %v607 = vadd.f32 %v606, %v601
        %v608 = vadd.f32 %v607, %v603
        %v609 = vrot.slane %v608, 4
        %v610 = vadd.f32 %v608, %v609
        %v611 = vrot.slane %v610, 2
        %v612 = vadd.f32 %v610, %v611
        %v613 = vrot.slane %v612, 1
        %v614 = vadd.f32 %v612, %v613
        %v615 = vadd.f32 %v605, %v614
        %616 = vst [vmem:[#allocation2] sm:$0x1] %v615
        %v617 = vld [vmem:[#allocation4] sm:$0x1]
        %v618 = vmul.f32 %v596, %v596
        %v619 = vmul.f32 %v598, %v598
        %v620 = vmul.f32 %v601, %v601
        %v621 = vmul.f32 %v603, %v603
        %v622 = vadd.f32 %v618, %v619
        %v623 = vadd.f32 %v622, %v620
        %v624 = vadd.f32 %v623, %v621
        %v625 = vrot.slane %v624, 4
        %v626 = vadd.f32 %v624, %v625
        %v627 = vrot.slane %v626, 2
        %v628 = vadd.f32 %v626, %v627
        %v629 = vrot.slane %v628, 1
        %v630 = vadd.f32 %v628, %v629
        %v631 = vadd.f32 %v617, %v630
        %632 = vst [vmem:[#allocation4] sm:$0x1] %v631
        // Predicated region
        $region37: #{tpu_custom_call.1} parent=31 // pred_check
          %p633 = pneg %p94
        $region38: #{tpu_custom_call.1} parent=31 // pred_check_branch
          %635 = sbr.rel (%p633) target = $region40
        $region39: #{tpu_custom_call.1} parent=31 // pred_region
          %637 = vsyncadd [#allocation3], 0
          %s639 = sshll.u32 [#allocation2], 4
          %s640 = int_to_ptr.vmem [resolvable:$true] %s639
          %s641 = sshll.u32 %s3, 4
          %s642 = int_to_ptr.hbm [resolvable:$true] %s641
          %644 = dma.vmem_to_hbm [thread:$0]  %s640, 16, %s642, [#allocation3]
        $region40: #{tpu_custom_call.1} parent=31 // pred_fallthru
          _
        // Predicated region
        $region41: #{tpu_custom_call.1} parent=31 // pred_check
          %p645 = pneg %p115
        $region42: #{tpu_custom_call.1} parent=31 // pred_check_branch
          %647 = sbr.rel (%p645) target = $region44
        $region43: #{tpu_custom_call.1} parent=31 // pred_region
          %649 = vsyncadd [#allocation5], 0
          %s651 = sshll.u32 [#allocation4], 4
          %s652 = int_to_ptr.vmem [resolvable:$true] %s651
          %s653 = sshll.u32 %s4, 4
          %s654 = int_to_ptr.hbm [resolvable:$true] %s653
          %656 = dma.vmem_to_hbm [thread:$0]  %s652, 16, %s654, [#allocation5]
        $region44: #{tpu_custom_call.1} parent=31 // pred_fallthru
          _
        // Predicated region
        $region45: #{tpu_custom_call.1} parent=31 // pred_check
          %p657 = pneg %p94
        $region46: #{tpu_custom_call.1} parent=31 // pred_check_branch
          %659 = sbr.rel (%p657) target = $region48
        $region47: #{tpu_custom_call.1} parent=31 // pred_region
          %661 = dma.done [#allocation3], 16
        $region48: #{tpu_custom_call.1} parent=31 // pred_fallthru
          _
        // Predicated region
        $region49: #{tpu_custom_call.1} parent=31 // pred_check
          %p662 = pneg %p115
        $region50: #{tpu_custom_call.1} parent=31 // pred_check_branch
          %664 = sbr.rel (%p662) target = $region52
        $region51: #{tpu_custom_call.1} parent=31 // pred_region
          %666 = dma.done [#allocation5], 16
        $region52: #{tpu_custom_call.1} parent=31 // pred_fallthru
          _
      $region32: #{tpu_custom_call.1} parent=5 // pred_fallthru
        _
      %p667 = scmp.le.s32.totalorder 2, %s13
      // Predicated region
      $region53: #{tpu_custom_call.1} parent=5 // pred_check
        %p668 = pneg %p667
      $region54: #{tpu_custom_call.1} parent=5 // pred_check_branch
        %670 = sbr.rel (%p668) target = $region56
      $region55: #{tpu_custom_call.1} parent=5 // pred_region
        %s671 = ssub.s32 %s13, 2
      $region56: #{tpu_custom_call.1} parent=5 // pred_fallthru
        _
    $region6: #{tpu_custom_call.1} parent=1 // loop_footer
      %s17 = sadd.s32 1, %s13
    $region7: #{tpu_custom_call.1} parent=1 // loop_footer_branch
      %12 = sbr.rel target = $region3
    $region8: #{tpu_custom_call.1} parent=1 // loop_exit
      _
    %672 = vsyncpa [#allocation3], 1
    %s673 = scalar_lea.sflag [#allocation3], 1
    %674 = vsyncpa %s673, 1
    %675 = vsyncpa [#allocation5], 1

</llo_original>
